<compile_context>
chip_gen: v5e
topology: v5e:2x2
jax: 0.10.0
libtpu: 0.0.40
codegen_flags: <defaults>
</compile_context>

<pallas_src>
import functools

import jax
import jax.numpy as jnp
from jax.experimental import pallas as pl
from jax.experimental.pallas import tpu as pltpu


IN_FEATURES = 4
HIDDEN = 128


def _round_up(n, m):
    return ((n + m - 1) // m) * m


def policy_kernel(x_ref, w1_ref, b1_ref, w2_ref, b2_ref, o_ref):
    """One batch tile: (tb, 4) -> (tb, A_pad) softmax probabilities."""
    x = x_ref[...]                       # (tb, 4)    f32
    w1 = w1_ref[...]                     # (4, 128)   f32

    # Layer 1 on the VPU. K=4 leaves the MXU systolic array ~97% idle, so the
    # matmul is rewritten as 4 broadcast multiply-adds on (tb, 128) vregs.
    h = b1_ref[...] + x[:, 0:1] * w1[0:1, :]
    for k in range(1, IN_FEATURES):
        h = h + x[:, k:k + 1] * w1[k:k + 1, :]
    h = jnp.maximum(h, 0.0)              # ReLU

    # Layer 2 on the MXU (K=128 reduction belongs there). w2/b2 are padded to a
    # lane-dense 128-wide output so the final store is an unmasked vst. Padded
    # columns of b2 are -1e30 (and w2 columns are zero), so padded logits are
    # -1e30 and their exp underflows to exactly 0 — no in-kernel mask needed.
    logits = jnp.dot(h, w2_ref[...], preferred_element_type=jnp.float32)
    logits = logits + b2_ref[...]        # (tb, A_pad)

    # Numerically stable softmax over dim=1.
    m = jnp.max(logits, axis=1, keepdims=True)
    e = jnp.exp(logits - m)
    denom = jnp.sum(e, axis=1, keepdims=True)
    o_ref[...] = e * pl.reciprocal(denom, approx=False)


def _choose_batch_tile(B, tile_b):
    """Pick a batch tile: as large as possible (fewer grid steps), but with at
    least 2 grid steps when the batch allows it so v7x megacore sharding has
    work for both TensorCores."""
    Bp8 = _round_up(B, 8)                # sublane-aligned batch
    tb = min(tile_b, Bp8)
    if Bp8 > 8 and Bp8 // tb < 2:
        # Single-step grid: split the batch in two (sublane-aligned) tiles.
        tb = max(8, _round_up((Bp8 + 1) // 2, 8))
    return tb


@functools.partial(jax.jit, static_argnames=("tile_b",))
def policy_forward(x, w1, b1, w2, b2, tile_b=1024):
    B, K = x.shape
    A = w2.shape[1]
    assert K == IN_FEATURES and w1.shape == (IN_FEATURES, HIDDEN)

    tb = _choose_batch_tile(B, tile_b)
    Bp = _round_up(B, tb)
    # Lane-dense output: pad the action dim up to a multiple of 128.
    Ap = _round_up(A, 128)

    x_p = x if Bp == B else jnp.pad(x, ((0, Bp - B), (0, 0)))
    w2_p = w2 if Ap == A else jnp.pad(w2, ((0, 0), (0, Ap - A)))
    # Pad the bias with -1e30 so padded action lanes are masked "for free":
    # padded w2 columns are 0, so padded logits == -1e30 -> exp -> 0.
    b2_p = b2 if Ap == A else jnp.pad(
        b2, ((0, 0), (0, Ap - A)), constant_values=jnp.float32(-1e30))

    grid = (Bp // tb,)
    vmem = pltpu.MemorySpace.VMEM

    cost = pl.CostEstimate(
        flops=2 * Bp * (IN_FEATURES * HIDDEN + HIDDEN * Ap) + 6 * Bp * Ap,
        transcendentals=Bp * Ap,
        bytes_accessed=4 * (x_p.size + w1.size + b1.size
                            + w2_p.size + b2_p.size + Bp * Ap),
    )

    out_p = pl.pallas_call(
        policy_kernel,
        out_shape=jax.ShapeDtypeStruct((Bp, Ap), jnp.float32),
        grid=grid,
        in_specs=[
            # Batch-tiled input (pipelined across the parallel grid).
            pl.BlockSpec((tb, IN_FEATURES), lambda i: (i, 0), memory_space=vmem),
            # Weights / biases: constant index_map -> VMEM-resident across steps.
            pl.BlockSpec((IN_FEATURES, HIDDEN), lambda i: (0, 0), memory_space=vmem),
            pl.BlockSpec((1, HIDDEN), lambda i: (0, 0), memory_space=vmem),
            pl.BlockSpec((HIDDEN, Ap), lambda i: (0, 0), memory_space=vmem),
            pl.BlockSpec((1, Ap), lambda i: (0, 0), memory_space=vmem),
        ],
        out_specs=pl.BlockSpec((tb, Ap), lambda i: (i, 0), memory_space=vmem),
        compiler_params=pltpu.CompilerParams(
            dimension_semantics=("parallel",),
        ),
        cost_estimate=cost,
    )(x_p, w1, b1, w2_p, b2_p)

    # Drop batch / action-lane padding.
    return out_p[:B, :A]


def init_policy_params(key, action_size):
    """Deterministic init mirroring torch.nn.Linear default
    (uniform in [-1/sqrt(fan_in), 1/sqrt(fan_in)])."""
    k1, k2, k3, k4 = jax.random.split(key, 4)
    in1, out1 = IN_FEATURES, HIDDEN
    in2, out2 = HIDDEN, action_size
    lim1 = 1.0 / jnp.sqrt(jnp.float32(in1))
    lim2 = 1.0 / jnp.sqrt(jnp.float32(in2))
    # Stored as (in, out): torch keeps (out, in) and applies x @ W.T;
    # here we pre-transpose so the kernel does x @ W.
    w1 = jax.random.uniform(k1, (in1, out1), jnp.float32, -lim1, lim1)
    b1 = jax.random.uniform(k2, (1, out1), jnp.float32, -lim1, lim1)
    w2 = jax.random.uniform(k3, (in2, out2), jnp.float32, -lim2, lim2)
    b2 = jax.random.uniform(k4, (1, out2), jnp.float32, -lim2, lim2)
    return w1, b1, w2, b2


def policy_forward_ref(x, w1, b1, w2, b2):
    """Pure-JAX reference. Layer 1 is expressed as the same sum of rank-1
    updates the kernel uses so both sides share f32 rounding behaviour."""
    h = b1 + sum(x[:, k:k + 1] * w1[k:k + 1, :] for k in range(IN_FEATURES))
    h = jnp.maximum(h, 0.0)
    logits = h @ w2 + b2
    return jax.nn.softmax(logits, axis=1)


if __name__ == "__main__":
    key = jax.random.PRNGKey(0)
    k_params, k_x = jax.random.split(key)

    action_size = 2          # e.g. CartPole
    batch = 64               # small batch; tile choice still yields a 2-step grid

    w1, b1, w2, b2 = init_policy_params(k_params, action_size)
    # The torch module casts the incoming numpy array to float32; here we just
    # build a float32 input directly.
    x = jax.random.normal(k_x, (batch, IN_FEATURES), jnp.float32)

    out = policy_forward(x, w1, b1, w2, b2)
    out = jax.block_until_ready(out)

    ref = policy_forward_ref(x, w1, b1, w2, b2)
    assert out.shape == (batch, action_size)
    assert jnp.allclose(out, ref, atol=1e-5, rtol=1e-5)
    # rows of a softmax must sum to 1
    assert jnp.allclose(jnp.sum(out, axis=1), jnp.ones((batch,)), atol=1e-5)

    print("KERNEL_OK")
</pallas_src>

<mosaic_0001>
module attributes {stable_mosaic.version = 11 : i64} {
  func.func @policy_kernel(%arg0: i32, %arg1: memref<32x4xf32, #tpu.memory_space<vmem>>, %arg2: memref<4x128xf32, #tpu.memory_space<vmem>>, %arg3: memref<1x128xf32, #tpu.memory_space<vmem>>, %arg4: memref<128x128xf32, #tpu.memory_space<vmem>>, %arg5: memref<1x128xf32, #tpu.memory_space<vmem>>, %arg6: memref<32x128xf32, #tpu.memory_space<vmem>>) attributes {dimension_semantics = [#tpu.dimension_semantics<parallel>], iteration_bounds = array<i64: 2>, scalar_prefetch = 0 : i64, scratch_operands = 0 : i64, tpu.core_type = #tpu.core_type<tc>, window_params = [{transform_indices = @transform_0, window_bounds = array<i64: 32, 4>}, {pipeline_mode = #tpu.pipeline_mode<synchronous>, transform_indices = @transform_1, window_bounds = array<i64: 4, 128>}, {pipeline_mode = #tpu.pipeline_mode<synchronous>, transform_indices = @transform_2, window_bounds = array<i64: 1, 128>}, {pipeline_mode = #tpu.pipeline_mode<synchronous>, transform_indices = @transform_3, window_bounds = array<i64: 128, 128>}, {pipeline_mode = #tpu.pipeline_mode<synchronous>, transform_indices = @transform_4, window_bounds = array<i64: 1, 128>}, {transform_indices = @transform_5, window_bounds = array<i64: 32, 128>}]} {
    %c0 = arith.constant 0 : index
    %c0_0 = arith.constant 0 : index
    %0 = vector.load %arg1[%c0, %c0_0] : memref<32x4xf32, #tpu.memory_space<vmem>>, vector<32x4xf32>
    %c0_1 = arith.constant 0 : index
    %c0_2 = arith.constant 0 : index
    %1 = vector.load %arg2[%c0_1, %c0_2] : memref<4x128xf32, #tpu.memory_space<vmem>>, vector<4x128xf32>
    %c0_3 = arith.constant 0 : index
    %c0_4 = arith.constant 0 : index
    %2 = vector.load %arg3[%c0_3, %c0_4] : memref<1x128xf32, #tpu.memory_space<vmem>>, vector<1x128xf32>
    %3 = vector.extract_strided_slice %0 {offsets = [0, 0], sizes = [32, 1], strides = [1, 1]} : vector<32x4xf32> to vector<32x1xf32>
    %4 = vector.extract_strided_slice %1 {offsets = [0, 0], sizes = [1, 128], strides = [1, 1]} : vector<4x128xf32> to vector<1x128xf32>
    %5 = vector.broadcast %3 : vector<32x1xf32> to vector<32x128xf32>
    %6 = vector.broadcast %4 : vector<1x128xf32> to vector<32x128xf32>
    %7 = arith.mulf %5, %6 : vector<32x128xf32>
    %8 = vector.broadcast %2 : vector<1x128xf32> to vector<32x128xf32>
    %9 = arith.addf %8, %7 : vector<32x128xf32>
    %10 = vector.extract_strided_slice %0 {offsets = [0, 1], sizes = [32, 1], strides = [1, 1]} : vector<32x4xf32> to vector<32x1xf32>
    %11 = vector.extract_strided_slice %1 {offsets = [1, 0], sizes = [1, 128], strides = [1, 1]} : vector<4x128xf32> to vector<1x128xf32>
    %12 = vector.broadcast %10 : vector<32x1xf32> to vector<32x128xf32>
    %13 = vector.broadcast %11 : vector<1x128xf32> to vector<32x128xf32>
    %14 = arith.mulf %12, %13 : vector<32x128xf32>
    %15 = arith.addf %9, %14 : vector<32x128xf32>
    %16 = vector.extract_strided_slice %0 {offsets = [0, 2], sizes = [32, 1], strides = [1, 1]} : vector<32x4xf32> to vector<32x1xf32>
    %17 = vector.extract_strided_slice %1 {offsets = [2, 0], sizes = [1, 128], strides = [1, 1]} : vector<4x128xf32> to vector<1x128xf32>
    %18 = vector.broadcast %16 : vector<32x1xf32> to vector<32x128xf32>
    %19 = vector.broadcast %17 : vector<1x128xf32> to vector<32x128xf32>
    %20 = arith.mulf %18, %19 : vector<32x128xf32>
    %21 = arith.addf %15, %20 : vector<32x128xf32>
    %22 = vector.extract_strided_slice %0 {offsets = [0, 3], sizes = [32, 1], strides = [1, 1]} : vector<32x4xf32> to vector<32x1xf32>
    %23 = vector.extract_strided_slice %1 {offsets = [3, 0], sizes = [1, 128], strides = [1, 1]} : vector<4x128xf32> to vector<1x128xf32>
    %24 = vector.broadcast %22 : vector<32x1xf32> to vector<32x128xf32>
    %25 = vector.broadcast %23 : vector<1x128xf32> to vector<32x128xf32>
    %26 = arith.mulf %24, %25 : vector<32x128xf32>
    %27 = arith.addf %21, %26 : vector<32x128xf32>
    %cst = arith.constant 0.000000e+00 : f32
    %28 = vector.broadcast %cst : f32 to vector<32x128xf32>
    %29 = arith.maximumf %27, %28 : vector<32x128xf32>
    %c0_5 = arith.constant 0 : index
    %c0_6 = arith.constant 0 : index
    %30 = vector.load %arg4[%c0_5, %c0_6] : memref<128x128xf32, #tpu.memory_space<vmem>>, vector<128x128xf32>
    %cst_7 = arith.constant dense<0.000000e+00> : vector<32x128xf32>
    %31 = tpu.matmul %29, %30, %cst_7 {dimension_numbers = #tpu.dot_dimension_numbers<[1], [0], [0], [1], [0, 0, 1, 1], [], []>} : vector<32x128xf32>, vector<128x128xf32>, vector<32x128xf32> -> vector<32x128xf32>
    %c0_8 = arith.constant 0 : index
    %c0_9 = arith.constant 0 : index
    %32 = vector.load %arg5[%c0_8, %c0_9] : memref<1x128xf32, #tpu.memory_space<vmem>>, vector<1x128xf32>
    %33 = vector.broadcast %32 : vector<1x128xf32> to vector<32x128xf32>
    %34 = arith.addf %31, %33 : vector<32x128xf32>
    %cst_10 = arith.constant dense<0xFF800000> : vector<32xf32>
    %35 = vector.multi_reduction <maximumf>, %34, %cst_10 [1] : vector<32x128xf32> to vector<32xf32>
    %36 = vector.shape_cast %35 : vector<32xf32> to vector<32x1xf32>
    %37 = vector.broadcast %36 : vector<32x1xf32> to vector<32x128xf32>
    %38 = arith.subf %34, %37 : vector<32x128xf32>
    %39 = math.exp %38 : vector<32x128xf32>
    %cst_11 = arith.constant dense<0.000000e+00> : vector<32xf32>
    %40 = vector.multi_reduction <add>, %39, %cst_11 [1] : vector<32x128xf32> to vector<32xf32>
    %41 = vector.shape_cast %40 : vector<32xf32> to vector<32x1xf32>
    %42 = tpu.reciprocal %41 : vector<32x1xf32> -> vector<32x1xf32>
    %43 = vector.broadcast %42 : vector<32x1xf32> to vector<32x128xf32>
    %44 = arith.mulf %39, %43 : vector<32x128xf32>
    %c0_12 = arith.constant 0 : index
    %c0_13 = arith.constant 0 : index
    %45 = vector.load %arg6[%c0_12, %c0_13] : memref<32x128xf32, #tpu.memory_space<vmem>>, vector<32x128xf32>
    tpu.vector_store %arg6[%c0_12, %c0_13], %44 {strides = array<i32>} : memref<32x128xf32, #tpu.memory_space<vmem>>, vector<32x128xf32>,
    return
  }
  func.func @transform_0(%arg0: i32) -> (i32, i32) {
    %c0_i32 = arith.constant 0 : i32
    %c0_i32_0 = arith.constant 0 : i32
    return %arg0, %c0_i32 : i32, i32
  }
  func.func @transform_1(%arg0: i32) -> (i32, i32) {
    %c0_i32 = arith.constant 0 : i32
    %c0_i32_0 = arith.constant 0 : i32
    %c0_i32_1 = arith.constant 0 : i32
    return %c0_i32, %c0_i32_0 : i32, i32
  }
  func.func @transform_2(%arg0: i32) -> (i32, i32) {
    %c0_i32 = arith.constant 0 : i32
    %c0_i32_0 = arith.constant 0 : i32
    %c0_i32_1 = arith.constant 0 : i32
    return %c0_i32, %c0_i32_0 : i32, i32
  }
  func.func @transform_3(%arg0: i32) -> (i32, i32) {
    %c0_i32 = arith.constant 0 : i32
    %c0_i32_0 = arith.constant 0 : i32
    %c0_i32_1 = arith.constant 0 : i32
    return %c0_i32, %c0_i32_0 : i32, i32
  }
  func.func @transform_4(%arg0: i32) -> (i32, i32) {
    %c0_i32 = arith.constant 0 : i32
    %c0_i32_0 = arith.constant 0 : i32
    %c0_i32_1 = arith.constant 0 : i32
    return %c0_i32, %c0_i32_0 : i32, i32
  }
  func.func @transform_5(%arg0: i32) -> (i32, i32) {
    %c0_i32 = arith.constant 0 : i32
    %c0_i32_0 = arith.constant 0 : i32
    return %arg0, %c0_i32 : i32, i32
  }
}

</mosaic_0001>

<llo_original>
// kernel: policy_forward.1
$region0: #{policy_forward.1}
  #allocation0 [shape = 'u32[]', space=smem, size = 0x4, offset = 0x4, fixed_abs, tag = 'smem constant byte address 0x4 - core index']
  #allocation1 [shape = 'u32[72,128]{1,0:T(1,128)}', space=vmem, size = 0x9000, scoped, tag = 'internal scratch']
  %s0 = inlined_call_operand.vmem [shape: f32[64,4], index: 0, kind: input, shape index: {}]
  %s1 = inlined_call_operand.vmem [shape: f32[4,128], index: 1, kind: input, shape index: {}]
  %s2 = inlined_call_operand.vmem [shape: f32[1,128], index: 2, kind: input, shape index: {}]
  %s3 = inlined_call_operand.vmem [shape: f32[128,128], index: 3, kind: input, shape index: {}]
  %s4 = inlined_call_operand.vmem [shape: f32[1,128], index: 4, kind: input, shape index: {}]
  %s5 = inlined_call_operand.vmem [shape: f32[64,128], index: 5, kind: output, shape index: {}]
  %s6 = sld [smem:[#allocation0]]
  $region53: #{policy_forward.1} parent=0
    _
  %s8 = ssub.s32 1, %s6
  %s9 = scalar_select 0, %s8, %s6
  loop: start=0, step=1, limit=4
  $region2: #{policy_forward.1} parent=0 // loop_pre_header
    _
  $region3: #{policy_forward.1} parent=0 // loop_header
    %s11 = sphi 0, %s15
    %p12 = scmp.ge.s32.totalorder %s11, 4
    %s21 = sphi 0, %s23
    %s24 = sphi 0, %s21
    %s25 = sphi 0, %s24
    %s41 = sphi 0, %s25
    %s45 = sphi 0, %s45
    %s47 = sphi 0, %s45
    %s48 = sphi 0, %s47
    %s62 = sphi 0, %s48
    %s66 = sphi 0, %s66
    %s68 = sphi 0, %s66
    %s69 = sphi 0, %s68
    %s83 = sphi 0, %s69
    %s87 = sphi 0, %s87
    %s89 = sphi 0, %s87
    %s90 = sphi 0, %s89
    %s104 = sphi 0, %s90
    %s108 = sphi 0, %s108
    %s110 = sphi 0, %s108
    %s111 = sphi 0, %s110
    %s125 = sphi 0, %s111
    %s131 = sphi 0, %s133
    %s134 = sphi 0, %s131
    %s135 = sphi 0, %s134
    %s151 = sphi 0, %s135
  $region4: #{policy_forward.1} parent=0 // loop_header_branch
    %14 = sbr.rel (%p12) target = $region8
  $region5: #{policy_forward.1} parent=0 // loop_body
    %s16 = ssub.s32 %s11, 1
    %s17 = ssub.s32 %s11, 2
    %s18 = sadd.s32 %s11, 1
    %s19 = ssub.s32 %s11, %s18
    %p20 = scmp.eq.s32.totalorder %s19, 0
    %s22 = sadd.s32 %s21, 1
    %s23 = scalar_select %p20, %s21, %s22
    %p26 = pneg %p20
    %p27 = scmp.eq.s32.totalorder %s11, 1
    %p28 = por %p26, %p27
    %p29 = scmp.ne.s32.totalorder %s21, %s24
    %p30 = scmp.eq.s32.totalorder %s11, 0
    %p31 = por %p29, %p30
    %p32 = scmp.ne.s32.totalorder %s21, %s24
    %p33 = scmp.eq.s32.totalorder %s16, 1
    %p34 = por %p32, %p33
    %p35 = scmp.ne.s32.totalorder %s24, %s25
    %p36 = scmp.eq.s32.totalorder %s16, 0
    %p37 = por %p35, %p36
    %p38 = scmp.ne.s32.totalorder %s24, %s25
    %p39 = scmp.eq.s32.totalorder %s17, 1
    %p40 = por %p38, %p39
    %p42 = scmp.ne.s32.totalorder %s25, %s41
    %p43 = scmp.eq.s32.totalorder %s17, 0
    %p44 = por %p42, %p43
    %s46 = sadd.s32 %s45, 1
    %p49 = scmp.eq.s32.totalorder %s11, 1
    %p50 = scmp.ne.s32.totalorder %s45, %s47
    %p51 = scmp.eq.s32.totalorder %s11, 0
    %p52 = por %p50, %p51
    %p53 = scmp.ne.s32.totalorder %s45, %s47
    %p54 = scmp.eq.s32.totalorder %s16, 1
    %p55 = por %p53, %p54
    %p56 = scmp.ne.s32.totalorder %s47, %s48
    %p57 = scmp.eq.s32.totalorder %s16, 0
    %p58 = por %p56, %p57
    %p59 = scmp.ne.s32.totalorder %s47, %s48
    %p60 = scmp.eq.s32.totalorder %s17, 1
    %p61 = por %p59, %p60
    %p63 = scmp.ne.s32.totalorder %s48, %s62
    %p64 = scmp.eq.s32.totalorder %s17, 0
    %p65 = por %p63, %p64
    %s67 = sadd.s32 %s66, 1
    %p70 = scmp.eq.s32.totalorder %s11, 1
    %p71 = scmp.ne.s32.totalorder %s66, %s68
    %p72 = scmp.eq.s32.totalorder %s11, 0
    %p73 = por %p71, %p72
    %p74 = scmp.ne.s32.totalorder %s66, %s68
    %p75 = scmp.eq.s32.totalorder %s16, 1
    %p76 = por %p74, %p75
    %p77 = scmp.ne.s32.totalorder %s68, %s69
    %p78 = scmp.eq.s32.totalorder %s16, 0
    %p79 = por %p77, %p78
    %p80 = scmp.ne.s32.totalorder %s68, %s69
    %p81 = scmp.eq.s32.totalorder %s17, 1
    %p82 = por %p80, %p81
    %p84 = scmp.ne.s32.totalorder %s69, %s83
    %p85 = scmp.eq.s32.totalorder %s17, 0
    %p86 = por %p84, %p85
    %s88 = sadd.s32 %s87, 1
    %p91 = scmp.eq.s32.totalorder %s11, 1
    %p92 = scmp.ne.s32.totalorder %s87, %s89
    %p93 = scmp.eq.s32.totalorder %s11, 0
    %p94 = por %p92, %p93
    %p95 = scmp.ne.s32.totalorder %s87, %s89
    %p96 = scmp.eq.s32.totalorder %s16, 1
    %p97 = por %p95, %p96
    %p98 = scmp.ne.s32.totalorder %s89, %s90
    %p99 = scmp.eq.s32.totalorder %s16, 0
    %p100 = por %p98, %p99
    %p101 = scmp.ne.s32.totalorder %s89, %s90
    %p102 = scmp.eq.s32.totalorder %s17, 1
    %p103 = por %p101, %p102
    %p105 = scmp.ne.s32.totalorder %s90, %s104
    %p106 = scmp.eq.s32.totalorder %s17, 0
    %p107 = por %p105, %p106
    %s109 = sadd.s32 %s108, 1
    %p112 = scmp.eq.s32.totalorder %s11, 1
    %p113 = scmp.ne.s32.totalorder %s108, %s110
    %p114 = scmp.eq.s32.totalorder %s11, 0
    %p115 = por %p113, %p114
    %p116 = scmp.ne.s32.totalorder %s108, %s110
    %p117 = scmp.eq.s32.totalorder %s16, 1
    %p118 = por %p116, %p117
    %p119 = scmp.ne.s32.totalorder %s110, %s111
    %p120 = scmp.eq.s32.totalorder %s16, 0
    %p121 = por %p119, %p120
    %p122 = scmp.ne.s32.totalorder %s110, %s111
    %p123 = scmp.eq.s32.totalorder %s17, 1
    %p124 = por %p122, %p123
    %p126 = scmp.ne.s32.totalorder %s111, %s125
    %p127 = scmp.eq.s32.totalorder %s17, 0
    %p128 = por %p126, %p127
    %s129 = ssub.s32 %s11, %s18
    %p130 = scmp.eq.s32.totalorder %s129, 0
    %s132 = sadd.s32 %s131, 1
    %s133 = scalar_select %p130, %s131, %s132
    %p136 = pneg %p130
    %p137 = scmp.eq.s32.totalorder %s11, 1
    %p138 = por %p136, %p137
    %p139 = scmp.ne.s32.totalorder %s131, %s134
    %p140 = scmp.eq.s32.totalorder %s11, 0
    %p141 = por %p139, %p140
    %p142 = scmp.ne.s32.totalorder %s131, %s134
    %p143 = scmp.eq.s32.totalorder %s16, 1
    %p144 = por %p142, %p143
    %p145 = scmp.ne.s32.totalorder %s134, %s135
    %p146 = scmp.eq.s32.totalorder %s16, 0
    %p147 = por %p145, %p146
    %p148 = scmp.ne.s32.totalorder %s134, %s135
    %p149 = scmp.eq.s32.totalorder %s17, 1
    %p150 = por %p148, %p149
    %p152 = scmp.ne.s32.totalorder %s135, %s151
    %p153 = scmp.eq.s32.totalorder %s17, 0
    %p154 = por %p152, %p153
    %p155 = scmp.le.s32.totalorder 1, %s11
    %p156 = scmp.lt.s32.totalorder %s11, 3
    %p157 = pnand %p155, %p156
    %p158 = pneg %p157
    // Predicated region
    $region9: #{policy_forward.1} parent=5 // pred_check
      _
    $region10: #{policy_forward.1} parent=5 // pred_check_branch
      %160 = sbr.rel (%p157) target = $region12
    $region11: #{policy_forward.1} parent=5 // pred_region
      %s161 = ssub.s32 %s11, 1
      // Predicated region
      $region13: #{policy_forward.1} parent=11 // pred_check
        %p162 = pneg %p58
      $region14: #{policy_forward.1} parent=11 // pred_check_branch
        %164 = sbr.rel (%p162) target = $region16
      $region15: #{policy_forward.1} parent=11 // pred_region
        _
      $region16: #{policy_forward.1} parent=11 // pred_fallthru
        _
      // Predicated region
      $region17: #{policy_forward.1} parent=11 // pred_check
        %p165 = pneg %p79
      $region18: #{policy_forward.1} parent=11 // pred_check_branch
        %167 = sbr.rel (%p165) target = $region20
      $region19: #{policy_forward.1} parent=11 // pred_region
        _
      $region20: #{policy_forward.1} parent=11 // pred_fallthru
        _
      // Predicated region
      $region21: #{policy_forward.1} parent=11 // pred_check
        %p168 = pneg %p100
      $region22: #{policy_forward.1} parent=11 // pred_check_branch
        %170 = sbr.rel (%p168) target = $region24
      $region23: #{policy_forward.1} parent=11 // pred_region
        _
      $region24: #{policy_forward.1} parent=11 // pred_fallthru
        _
      // Predicated region
      $region25: #{policy_forward.1} parent=11 // pred_check
        %p171 = pneg %p121
      $region26: #{policy_forward.1} parent=11 // pred_check_branch
        %173 = sbr.rel (%p171) target = $region28
      $region27: #{policy_forward.1} parent=11 // pred_region
        _
      $region28: #{policy_forward.1} parent=11 // pred_fallthru
        _
    $region12: #{policy_forward.1} parent=5 // pred_fallthru
      _
    %p174 = scmp.lt.s32.totalorder %s11, 2
    // Predicated region
    $region29: #{policy_forward.1} parent=5 // pred_check
      %p175 = pneg %p174
    $region30: #{policy_forward.1} parent=5 // pred_check_branch
      %177 = sbr.rel (%p175) target = $region32
    $region31: #{policy_forward.1} parent=5 // pred_region
      // Predicated region
      $region33: #{policy_forward.1} parent=31 // pred_check
        %p178 = pneg %p31
      $region34: #{policy_forward.1} parent=31 // pred_check_branch
        %180 = sbr.rel (%p178) target = $region36
      $region35: #{policy_forward.1} parent=31 // pred_region
        %s181 = smul.u32 4, %s11
        %p182 = scmp.lt.s32.totalorder %s181, 7
        %s183 = scalar_select %p182, %s181, 7
        %s184 = smul.addr %s183, 8
        %s185 = scalar_lea.vmem %s0, %s184
        %s186 = smul.u32 4, %s11
      $region36: #{policy_forward.1} parent=31 // pred_fallthru
        _
    $region32: #{policy_forward.1} parent=5 // pred_fallthru
      _
    %p187 = scmp.le.s32.totalorder 1, %s11
    %p188 = scmp.lt.s32.totalorder %s11, 3
    %p189 = pnand %p187, %p188
    %p190 = pneg %p189
    // Predicated region
    $region37: #{policy_forward.1} parent=5 // pred_check
      _
    $region38: #{policy_forward.1} parent=5 // pred_check_branch
      %192 = sbr.rel (%p189) target = $region40
    $region39: #{policy_forward.1} parent=5 // pred_region
      %s193 = ssub.s32 %s11, 1
      %s194 = smul.u32 4, %s16
      %p195 = scmp.lt.s32.totalorder %s194, 7
      %s196 = scalar_select %p195, %s194, 7
      %s197 = smul.addr %s196, 8
      %s198 = scalar_lea.vmem %s0, %s197
      %p199 = pneg %p37
      %p200 = pneg %p34
      %p201 = pneg %p58
      %p202 = pneg %p55
      %p203 = pneg %p79
      %p204 = pneg %p76
      %p205 = pneg %p100
      %p206 = pneg %p97
      %p207 = pneg %p121
      %p208 = pneg %p118
      %p209 = pneg %p147
      %p210 = pneg %p144
      %s211 = smul.u32 4, %s16
      %p212 = scmp.lt.s32.totalorder %s211, 7
      %s213 = scalar_select %p212, %s211, 7
      %s214 = smul.addr %s213, 8
      %s215 = scalar_lea.vmem %s5, %s214
      %s216 = smul.u32 4, %s16
      %p217 = scmp.lt.s32.totalorder %s216, 7
      %s218 = scalar_select %p217, %s216, 7
      %s219 = smul.addr %s218, 8
      %s220 = scalar_lea.vmem %s0, %s219
      %s221 = smul.u32 4, %s16
      %s222 = smul.u32 4, %s16
      %p223 = scmp.lt.s32.totalorder %s222, 7
      %s224 = scalar_select %p223, %s222, 7
      %s225 = smul.addr %s224, 8
      %s226 = scalar_lea.vmem %s5, %s225
      %s227 = smul.u32 4, %s16
      %v228 = vld [vmem:[%s220] sm:$0xff]
      %v229 = vld [vmem:[%s220 + $0x8] sm:$0xff]
      %v230 = vld [vmem:[%s220 + $0x10] sm:$0xff]
      %v231 = vld [vmem:[%s220 + $0x18] sm:$0xff]
      %v232 = vld [vmem:[%s1] sm:$0xf]
      %v233 = vld [vmem:[%s2] sm:$0x1]
      %235 = vset.pattern.permute.xlu0 0
      %236 = vperm.xlu0 %235, %v228
      %v237 = vpop.permute.xlu0 %236
      %240 = vset.pattern.permute.xlu0 0
      %241 = vperm.xlu0 %240, %v229
      %v242 = vpop.permute.xlu0 %241
      %245 = vset.pattern.permute.xlu0 0
      %246 = vperm.xlu0 %245, %v230
      %v247 = vpop.permute.xlu0 %246
      %250 = vset.pattern.permute.xlu0 0
      %251 = vperm.xlu0 %250, %v231
      %v252 = vpop.permute.xlu0 %251
      %v254 = vperm.slane %v232, 0
      %v255 = vmul.f32 %v237, %v254
      %v256 = vmul.f32 %v242, %v254
      %v257 = vmul.f32 %v247, %v254
      %v258 = vmul.f32 %v252, %v254
      %v260 = vperm.slane %v233, 0
      %v262 = vadd.f32 %v260, %v255
      %v263 = vadd.f32 %v260, %v256
      %v264 = vadd.f32 %v260, %v257
      %v265 = vadd.f32 %v260, %v258
      %266 = vset.pattern.permute.xlu0 1
      %267 = vperm.xlu0 %266, %v228
      %v268 = vpop.permute.xlu0 %267
      %270 = vset.pattern.permute.xlu0 1
      %271 = vperm.xlu0 %270, %v229
      %v272 = vpop.permute.xlu0 %271
      %274 = vset.pattern.permute.xlu0 1
      %275 = vperm.xlu0 %274, %v230
      %v276 = vpop.permute.xlu0 %275
      %278 = vset.pattern.permute.xlu0 1
      %279 = vperm.xlu0 %278, %v231
      %v280 = vpop.permute.xlu0 %279
      %v282 = vperm.slane %v232, 1
      %v283 = vmul.f32 %v268, %v282
      %v284 = vmul.f32 %v272, %v282
      %v285 = vmul.f32 %v276, %v282
      %v286 = vmul.f32 %v280, %v282
      %v287 = vadd.f32 %v262, %v283
      %v288 = vadd.f32 %v263, %v284
      %v289 = vadd.f32 %v264, %v285
      %v290 = vadd.f32 %v265, %v286
      %291 = vset.pattern.permute.xlu0 2
      %292 = vperm.xlu0 %291, %v228
      %v293 = vpop.permute.xlu0 %292
      %295 = vset.pattern.permute.xlu0 2
      %296 = vperm.xlu0 %295, %v229
      %v297 = vpop.permute.xlu0 %296
      %299 = vset.pattern.permute.xlu0 2
      %300 = vperm.xlu0 %299, %v230
      %v301 = vpop.permute.xlu0 %300
      %303 = vset.pattern.permute.xlu0 2
      %304 = vperm.xlu0 %303, %v231
      %v305 = vpop.permute.xlu0 %304
      %v307 = vperm.slane %v232, 2
      %v308 = vmul.f32 %v293, %v307
      %v309 = vmul.f32 %v297, %v307
      %v310 = vmul.f32 %v301, %v307
      %v311 = vmul.f32 %v305, %v307
      %v312 = vadd.f32 %v287, %v308
      %v313 = vadd.f32 %v288, %v309
      %v314 = vadd.f32 %v289, %v310
      %v315 = vadd.f32 %v290, %v311
      %316 = vset.pattern.permute.xlu0 3
      %317 = vperm.xlu0 %316, %v228
      %v318 = vpop.permute.xlu0 %317
      %320 = vset.pattern.permute.xlu0 3
      %321 = vperm.xlu0 %320, %v229
      %v322 = vpop.permute.xlu0 %321
      %324 = vset.pattern.permute.xlu0 3
      %325 = vperm.xlu0 %324, %v230
      %v326 = vpop.permute.xlu0 %325
      %328 = vset.pattern.permute.xlu0 3
      %329 = vperm.xlu0 %328, %v231
      %v330 = vpop.permute.xlu0 %329
      %v332 = vperm.slane %v232, 3
      %v333 = vmul.f32 %v318, %v332
      %v334 = vmul.f32 %v322, %v332
      %v335 = vmul.f32 %v326, %v332
      %v336 = vmul.f32 %v330, %v332
      %v337 = vadd.f32 %v312, %v333
      %v338 = vadd.f32 %v313, %v334
      %v339 = vadd.f32 %v314, %v335
      %v340 = vadd.f32 %v315, %v336
      %v341 = vmax.f32 %v337, 0.0
      %v342 = vmax.f32 %v338, 0.0
      %v343 = vmax.f32 %v339, 0.0
      %v344 = vmax.f32 %v340, 0.0
      %v345 = vld [vmem:[%s3] sm:$0xff]
      %v346 = vld [vmem:[%s3 + $0x8] sm:$0xff]
      %v347 = vld [vmem:[%s3 + $0x10] sm:$0xff]
      %v348 = vld [vmem:[%s3 + $0x18] sm:$0xff]
      %v349 = vld [vmem:[%s3 + $0x20] sm:$0xff]
      %v350 = vld [vmem:[%s3 + $0x28] sm:$0xff]
      %v351 = vld [vmem:[%s3 + $0x30] sm:$0xff]
      %v352 = vld [vmem:[%s3 + $0x38] sm:$0xff]
      %v353 = vld [vmem:[%s3 + $0x40] sm:$0xff]
      %v354 = vld [vmem:[%s3 + $0x48] sm:$0xff]
      %v355 = vld [vmem:[%s3 + $0x50] sm:$0xff]
      %v356 = vld [vmem:[%s3 + $0x58] sm:$0xff]
      %v357 = vld [vmem:[%s3 + $0x60] sm:$0xff]
      %v358 = vld [vmem:[%s3 + $0x68] sm:$0xff]
      %v359 = vld [vmem:[%s3 + $0x70] sm:$0xff]
      %v360 = vld [vmem:[%s3 + $0x78] sm:$0xff]
      %v361 = vld [vmem:[%s4] sm:$0x1]
      %v363 = vperm.slane %v361, 0
      %365 = vmatpush.msra.mxu0 %v360
      %366 = vmatpush.msra.mxu0 %v359
      %367 = vmatpush.msra.mxu0 %v358
      %368 = vmatpush.msra.mxu0 %v357
      %369 = vmatpush.msra.mxu0 %v356
      %370 = vmatpush.msra.mxu0 %v355
      %371 = vmatpush.msra.mxu0 %v354
      %372 = vmatpush.msra.mxu0 %v353
      %373 = vmatpush.msra.mxu0 %v352
      %374 = vmatpush.msra.mxu0 %v351
      %375 = vmatpush.msra.mxu0 %v350
      %376 = vmatpush.msra.mxu0 %v349
      %377 = vmatpush.msra.mxu0 %v348
      %378 = vmatpush.msra.mxu0 %v347
      %379 = vmatpush.msra.mxu0 %v346
      %380 = vmatpush.msra.mxu0 %v345
      %381 = vmatmul.f32.gmra.mxu0 %v341
      %v382 = vpop.f32.mrf.mxu0
      %v383 = vadd.f32 %v363, %v382
      %384 = vmatmul.f32.gmra.mxu0 %v342
      %v385 = vpop.f32.mrf.mxu0
      %v386 = vadd.f32 %v363, %v385
      %387 = vmatmul.f32.gmra.mxu0 %v343
      %v388 = vpop.f32.mrf.mxu0
      %v389 = vadd.f32 %v363, %v388
      %390 = vmatmul.f32.gmra.mxu0 %v344
      %v391 = vpop.f32.mrf.mxu0
      %v392 = vadd.f32 %v363, %v391
      %393 = vdwg.mxu0
      %394 = vmax.xlane.f32.xlu0 %v383
      %v395 = vpop.xlane.xlu0 %394
      %396 = vmax.xlane.f32.xlu0 %v386
      %v397 = vpop.xlane.xlu0 %396
      %398 = vmax.xlane.f32.xlu0 %v389
      %v399 = vpop.xlane.xlu0 %398
      %400 = vmax.xlane.f32.xlu0 %v392
      %v401 = vpop.xlane.xlu0 %400
      %v402 = vsub.f32 %v383, %v395
      %v403 = vsub.f32 %v386, %v397
      %v404 = vsub.f32 %v389, %v399
      %v405 = vsub.f32 %v392, %v401
      %v406 = vmul.f32 %v402, 1.442695
      %v407 = vpow.pop %v406
      %v408 = vmul.f32 %v403, 1.442695
      %v409 = vpow.pop %v408
      %v410 = vmul.f32 %v404, 1.442695
      %v411 = vpow.pop %v410
      %v412 = vmul.f32 %v405, 1.442695
      %v413 = vpow.pop %v412
      %414 = vadd.xlane.f32.xlu0 %v407
      %v415 = vpop.xlane.xlu0 %414
      %416 = vadd.xlane.f32.xlu0 %v409
      %v417 = vpop.xlane.xlu0 %416
      %418 = vadd.xlane.f32.xlu0 %v411
      %v419 = vpop.xlane.xlu0 %418
      %420 = vadd.xlane.f32.xlu0 %v413
      %v421 = vpop.xlane.xlu0 %420
      %v422 = vrcp.pop %v415
      %v423 = vmul.f32 %v415, %v422
      %v424 = vsub.f32 1.0, %v423
      %v425 = vmul.f32 %v422, %v424
      %v426 = vadd.f32 %v422, %v425
      %vm427 = vweird.f32 %v415
      %vm428 = vweird.f32 %v422
      %vm429 = vmor %vm427, %vm428
      %v430 = vsel %vm429, %v422, %v426
      %v431 = vand.u32 2147483647, %v415
      %vm432 = vcmp.eq.f32.partialorder %v431, 8.507059e+37
      %v433 = vand.u32 %v415, 2147483648
      %v434 = vor.u32 1.1754944e-38, %v433
      %v435 = vsel %vm432, %v434, %v430
      %v436 = vrcp.pop %v417
      %v437 = vmul.f32 %v417, %v436
      %v438 = vsub.f32 1.0, %v437
      %v439 = vmul.f32 %v436, %v438
      %v440 = vadd.f32 %v436, %v439
      %vm441 = vweird.f32 %v417
      %vm442 = vweird.f32 %v436
      %vm443 = vmor %vm441, %vm442
      %v444 = vsel %vm443, %v436, %v440
      %v445 = vand.u32 2147483647, %v417
      %vm446 = vcmp.eq.f32.partialorder %v445, 8.507059e+37
      %v447 = vand.u32 %v417, 2147483648
      %v448 = vor.u32 1.1754944e-38, %v447
      %v449 = vsel %vm446, %v448, %v444
      %v450 = vrcp.pop %v419
      %v451 = vmul.f32 %v419, %v450
      %v452 = vsub.f32 1.0, %v451
      %v453 = vmul.f32 %v450, %v452
      %v454 = vadd.f32 %v450, %v453
      %vm455 = vweird.f32 %v419
      %vm456 = vweird.f32 %v450
      %vm457 = vmor %vm455, %vm456
      %v458 = vsel %vm457, %v450, %v454
      %v459 = vand.u32 2147483647, %v419
      %vm460 = vcmp.eq.f32.partialorder %v459, 8.507059e+37
      %v461 = vand.u32 %v419, 2147483648
      %v462 = vor.u32 1.1754944e-38, %v461
      %v463 = vsel %vm460, %v462, %v458
      %v464 = vrcp.pop %v421
      %v465 = vmul.f32 %v421, %v464
      %v466 = vsub.f32 1.0, %v465
      %v467 = vmul.f32 %v464, %v466
      %v468 = vadd.f32 %v464, %v467
      %vm469 = vweird.f32 %v421
      %vm470 = vweird.f32 %v464
      %vm471 = vmor %vm469, %vm470
      %v472 = vsel %vm471, %v464, %v468
      %v473 = vand.u32 2147483647, %v421
      %vm474 = vcmp.eq.f32.partialorder %v473, 8.507059e+37
      %v475 = vand.u32 %v421, 2147483648
      %v476 = vor.u32 1.1754944e-38, %v475
      %v477 = vsel %vm474, %v476, %v472
      %v478 = vmul.f32 %v407, %v435
      %v479 = vmul.f32 %v409, %v449
      %v480 = vmul.f32 %v411, %v463
      %v481 = vmul.f32 %v413, %v477
      %482 = vst [vmem:[%s226] sm:$0xff] %v478
      %483 = vst [vmem:[%s226 + $0x8] sm:$0xff] %v479
      %484 = vst [vmem:[%s226 + $0x10] sm:$0xff] %v480
      %485 = vst [vmem:[%s226 + $0x18] sm:$0xff] %v481
      %s486 = smul.u32 4, %s16
      %p487 = scmp.lt.s32.totalorder %s486, 7
      %s488 = scalar_select %p487, %s486, 7
      %s489 = smul.addr %s488, 8
      %s490 = scalar_lea.vmem %s5, %s489
      // Predicated region
      $region41: #{policy_forward.1} parent=39 // pred_check
        %p491 = pneg %p144
      $region42: #{policy_forward.1} parent=39 // pred_check_branch
        %493 = sbr.rel (%p491) target = $region44
      $region43: #{policy_forward.1} parent=39 // pred_region
        %s494 = smul.u32 4, %s16
      $region44: #{policy_forward.1} parent=39 // pred_fallthru
        _
    $region40: #{policy_forward.1} parent=5 // pred_fallthru
      _
    %p495 = scmp.le.s32.totalorder 2, %s11
    // Predicated region
    $region45: #{policy_forward.1} parent=5 // pred_check
      %p496 = pneg %p495
    $region46: #{policy_forward.1} parent=5 // pred_check_branch
      %498 = sbr.rel (%p496) target = $region48
    $region47: #{policy_forward.1} parent=5 // pred_region
      %s499 = ssub.s32 %s11, 2
      // Predicated region
      $region49: #{policy_forward.1} parent=47 // pred_check
        %p500 = pneg %p150
      $region50: #{policy_forward.1} parent=47 // pred_check_branch
        %502 = sbr.rel (%p500) target = $region52
      $region51: #{policy_forward.1} parent=47 // pred_region
        %s503 = smul.u32 4, %s17
        %p504 = scmp.lt.s32.totalorder %s503, 7
        %s505 = scalar_select %p504, %s503, 7
        %s506 = smul.addr %s505, 8
        %s507 = scalar_lea.vmem %s5, %s506
      $region52: #{policy_forward.1} parent=47 // pred_fallthru
        _
    $region48: #{policy_forward.1} parent=5 // pred_fallthru
      _
  $region6: #{policy_forward.1} parent=0 // loop_footer
    %s15 = sadd.s32 1, %s11
  $region7: #{policy_forward.1} parent=0 // loop_footer_branch
    %10 = sbr.rel target = $region3
  $region8: #{policy_forward.1} parent=0 // loop_exit
    _

</llo_original>
